<compile_context>
chip_gen: v5e
topology: v5e:2x2
jax: 0.10.0
libtpu: 0.0.40
codegen_flags: <defaults>
</compile_context>

<pallas_src>
import jax
import jax.numpy as jnp
from jax.experimental import pallas as pl
from jax.experimental.pallas import tpu as pltpu


def _johnson_kernel(x_ref, lo_ref, hi_ref, p_ref, out_ref):
    # x_ref:   (tn, F)              float32  batch tile
    # lo_ref:  (bits, F)            float32  lower edge per (bit, feature) (+inf if unreachable)
    # hi_ref:  (bits, F)            float32  upper edge per (bit, feature) (+inf if unbounded)
    # p_ref:   (bits*F, F*bits)     bfloat16 0/1 permutation: P[i*F + f, f*bits + i] = 1
    # out_ref: (tn, F*bits)         float32  lane-dense output tile
    bits = lo_ref.shape[0]
    x = x_ref[...]                                     # (tn, F)
    codes = []
    for i in range(bits):                              # bits is small & static -> unrolled
        lo = lo_ref[pl.ds(i, 1), :]                    # (1, F), sublane-broadcast row
        hi = hi_ref[pl.ds(i, 1), :]                    # (1, F)
        codes.append(jnp.logical_and(lo <= x, x < hi).astype(jnp.bfloat16))   # (tn, F)
    code_bm = jnp.concatenate(codes, axis=-1)          # (tn, bits*F), bit-major columns
    # Interleave bit-major -> feature-major (col f*bits + i) on the MXU; exact for 0/1 values.
    out_ref[...] = jnp.dot(code_bm, p_ref[...], preferred_element_type=jnp.float32)


def _round_up(v, m):
    return (v + m - 1) // m * m


def _pick_batch_tile(n, f, bits, vmem_budget_bytes=12 << 20, tn_cap=2048):
    # Double-buffered f32 x + out tiles, plus the single-buffered bf16 bit-major intermediate.
    bytes_per_row = 2 * 4 * f * (1 + bits) + 2 * f * bits
    tn = vmem_budget_bytes // max(bytes_per_row, 1)
    tn = min(tn, tn_cap, _round_up(n, 8))
    return max(8, (tn // 8) * 8)


def _interval_tables(edges, bits):
    """(bits, F) lower/upper thresholds so that, for bit i and feature f,
       (lo[i,f] <= x) & (x < hi[i,f])  ==  bits-i-1 < bucketize(x, edges[f], right=True)-1 <= 2*bits-i-1.
       Valid because each edges row is sorted (finite increasing prefix, then +inf padding)."""
    f, e = edges.shape
    need = 2 * bits + 1                      # largest edge index referenced is 2*bits
    if e < need:
        pad = jnp.full((f, need - e), jnp.inf, edges.dtype)
        edges_pad = jnp.concatenate([edges, pad], axis=1)
    else:
        edges_pad = edges
    idx = jnp.arange(bits)
    lo = edges_pad[:, bits - idx].T          # (bits, F)
    hi = edges_pad[:, 2 * bits - idx].T      # (bits, F)
    return lo.astype(jnp.float32), hi.astype(jnp.float32)


def _placement_matrix(f, bits):
    """(bits*F, F*bits) 0/1 permutation with P[i*F + f, f*bits + i] = 1 (bf16, exact)."""
    r = jnp.arange(bits * f)
    col = (r % f) * bits + (r // f)                                     # target column per row
    return (col[:, None] == jnp.arange(f * bits)[None, :]).astype(jnp.bfloat16)


def johnson_encoding(x, edges, bits, tn=None):
    """x: (N, F) float32, edges: (F, E) float32 (inf padded). Returns (N, F*bits) float32."""
    n, f = x.shape
    fb = f * bits
    if tn is None:
        tn = _pick_batch_tile(n, f, bits)

    lo_tab, hi_tab = _interval_tables(edges, bits)
    p = _placement_matrix(f, bits)

    return pl.pallas_call(
        _johnson_kernel,
        out_shape=jax.ShapeDtypeStruct((n, fb), jnp.float32),
        grid=(pl.cdiv(n, tn),),
        in_specs=[
            pl.BlockSpec((tn, f), lambda i: (i, 0)),            # x tile over batch
            pl.BlockSpec((bits, f), lambda i: (0, 0)),          # constant tables (same block each step)
            pl.BlockSpec((bits, f), lambda i: (0, 0)),
            pl.BlockSpec((bits * f, fb), lambda i: (0, 0)),     # permutation matrix
        ],
        out_specs=pl.BlockSpec((tn, fb), lambda i: (i, 0)),     # lane-dense output tile
        compiler_params=pltpu.CompilerParams(
            dimension_semantics=("parallel",),   # megacore-shard the batch axis
            vmem_limit_bytes=32 << 20,           # safe headroom on v5e/v6e/v7x
        ),
    )(x, lo_tab, hi_tab, p)


def _reference(x, edges, bits):
    """Pure-JAX reference of the PyTorch forward (bucketize count + temp_code)."""
    num = jnp.sum(edges[None, :, :] <= x[:, :, None], axis=-1) - 1
    i = jnp.arange(bits)
    numb = num[..., None]
    code = jnp.logical_and(bits - i - 1 < numb, numb <= 2 * bits - i - 1)
    return code.astype(jnp.float32).reshape(x.shape[0], -1)


def _build_edges(bins):
    """Replicates _JohnsonEncodingImpl.__init__ buffer construction (edges only)."""
    max_n_edges = max(len(b) for b in bins)
    rows = []
    for b in bins:
        padded = jnp.concatenate(
            [b, jnp.full((max_n_edges,), jnp.inf, dtype=b.dtype)])[:max_n_edges]
        rows.append(padded)
    edges_full = jnp.stack(rows)           # (F, max_n_edges)
    edges = edges_full[:, :-1]             # register_buffer('edges', edges[:, :-1])
    max_bin = edges.shape[1]
    bits = (max_bin + 1) // 2              # code_length
    return edges.astype(jnp.float32), bits


if __name__ == "__main__":
    # Deterministic synthetic bins (sorted edges, >= 2 edges per feature), F = 4 features.
    bins = [
        jnp.linspace(-1.0, 1.0, 6, dtype=jnp.float32),   # 5 bins
        jnp.linspace(0.0, 2.0, 5, dtype=jnp.float32),    # 4 bins
        jnp.linspace(-3.0, 3.0, 7, dtype=jnp.float32),   # 6 bins
        jnp.linspace(0.5, 4.5, 7, dtype=jnp.float32),    # 6 bins
    ]
    edges, bits = _build_edges(bins)       # edges: (4, 6), bits = 3

    key = jax.random.PRNGKey(0)
    n, f = 16, 4
    x = jax.random.normal(key, (n, f), dtype=jnp.float32) * 2.0  # (N, F)

    out = jax.block_until_ready(johnson_encoding(x, edges, bits))
    ref = _reference(x, edges, bits)
    assert out.shape == (n, f * bits), out.shape
    assert jnp.allclose(out, ref), "kernel output mismatch vs reference"

    # Ragged / multi-step grid path: N not a multiple of tn, no jnp.pad, OOB rows dropped.
    n2 = 20
    x2 = jax.random.normal(jax.random.PRNGKey(1), (n2, f), dtype=jnp.float32) * 2.0
    out2 = jax.block_until_ready(johnson_encoding(x2, edges, bits, tn=8))
    assert jnp.allclose(out2, _reference(x2, edges, bits)), "ragged-grid mismatch vs reference"

    print("KERNEL_OK")
</pallas_src>

<mosaic_0001>
module attributes {stable_mosaic.version = 11 : i64} {
  func.func @_johnson_kernel(%arg0: i32, %arg1: memref<16x4xf32, #tpu.memory_space<vmem>>, %arg2: memref<3x4xf32, #tpu.memory_space<vmem>>, %arg3: memref<3x4xf32, #tpu.memory_space<vmem>>, %arg4: memref<12x12xbf16, #tpu.memory_space<vmem>>, %arg5: memref<16x12xf32, #tpu.memory_space<vmem>>) attributes {dimension_semantics = [#tpu.dimension_semantics<parallel>], iteration_bounds = array<i64: 1>, scalar_prefetch = 0 : i64, scratch_operands = 0 : i64, tpu.core_type = #tpu.core_type<tc>, window_params = [{transform_indices = @transform_0, window_bounds = array<i64: 16, 4>}, {pipeline_mode = #tpu.pipeline_mode<synchronous>, transform_indices = @transform_1, window_bounds = array<i64: 3, 4>}, {pipeline_mode = #tpu.pipeline_mode<synchronous>, transform_indices = @transform_2, window_bounds = array<i64: 3, 4>}, {pipeline_mode = #tpu.pipeline_mode<synchronous>, transform_indices = @transform_3, window_bounds = array<i64: 12, 12>}, {transform_indices = @transform_4, window_bounds = array<i64: 16, 12>}]} {
    %c0 = arith.constant 0 : index
    %c0_0 = arith.constant 0 : index
    %0 = vector.load %arg1[%c0, %c0_0] : memref<16x4xf32, #tpu.memory_space<vmem>>, vector<16x4xf32>
    %c0_1 = arith.constant 0 : index
    %c0_2 = arith.constant 0 : index
    %1 = vector.load %arg2[%c0_1, %c0_2] : memref<3x4xf32, #tpu.memory_space<vmem>>, vector<1x4xf32>
    %c0_3 = arith.constant 0 : index
    %c0_4 = arith.constant 0 : index
    %2 = vector.load %arg3[%c0_3, %c0_4] : memref<3x4xf32, #tpu.memory_space<vmem>>, vector<1x4xf32>
    %3 = vector.broadcast %1 : vector<1x4xf32> to vector<16x4xf32>
    %4 = arith.cmpf ole, %3, %0 : vector<16x4xf32>
    %5 = vector.broadcast %2 : vector<1x4xf32> to vector<16x4xf32>
    %6 = arith.cmpf olt, %0, %5 : vector<16x4xf32>
    %7 = arith.andi %4, %6 : vector<16x4xi1>
    %8 = arith.extui %7 : vector<16x4xi1> to vector<16x4xi32>
    %9 = arith.sitofp %8 : vector<16x4xi32> to vector<16x4xf32>
    %10 = arith.truncf %9 : vector<16x4xf32> to vector<16x4xbf16>
    %c1 = arith.constant 1 : index
    %c0_5 = arith.constant 0 : index
    %11 = vector.load %arg2[%c1, %c0_5] : memref<3x4xf32, #tpu.memory_space<vmem>>, vector<1x4xf32>
    %c1_6 = arith.constant 1 : index
    %c0_7 = arith.constant 0 : index
    %12 = vector.load %arg3[%c1_6, %c0_7] : memref<3x4xf32, #tpu.memory_space<vmem>>, vector<1x4xf32>
    %13 = vector.broadcast %11 : vector<1x4xf32> to vector<16x4xf32>
    %14 = arith.cmpf ole, %13, %0 : vector<16x4xf32>
    %15 = vector.broadcast %12 : vector<1x4xf32> to vector<16x4xf32>
    %16 = arith.cmpf olt, %0, %15 : vector<16x4xf32>
    %17 = arith.andi %14, %16 : vector<16x4xi1>
    %18 = arith.extui %17 : vector<16x4xi1> to vector<16x4xi32>
    %19 = arith.sitofp %18 : vector<16x4xi32> to vector<16x4xf32>
    %20 = arith.truncf %19 : vector<16x4xf32> to vector<16x4xbf16>
    %c2 = arith.constant 2 : index
    %c0_8 = arith.constant 0 : index
    %21 = vector.load %arg2[%c2, %c0_8] : memref<3x4xf32, #tpu.memory_space<vmem>>, vector<1x4xf32>
    %c2_9 = arith.constant 2 : index
    %c0_10 = arith.constant 0 : index
    %22 = vector.load %arg3[%c2_9, %c0_10] : memref<3x4xf32, #tpu.memory_space<vmem>>, vector<1x4xf32>
    %23 = vector.broadcast %21 : vector<1x4xf32> to vector<16x4xf32>
    %24 = arith.cmpf ole, %23, %0 : vector<16x4xf32>
    %25 = vector.broadcast %22 : vector<1x4xf32> to vector<16x4xf32>
    %26 = arith.cmpf olt, %0, %25 : vector<16x4xf32>
    %27 = arith.andi %24, %26 : vector<16x4xi1>
    %28 = arith.extui %27 : vector<16x4xi1> to vector<16x4xi32>
    %29 = arith.sitofp %28 : vector<16x4xi32> to vector<16x4xf32>
    %30 = arith.truncf %29 : vector<16x4xf32> to vector<16x4xbf16>
    %31 = tpu.concatenate %10, %20, %30 in 1 : vector<16x4xbf16>, vector<16x4xbf16>, vector<16x4xbf16> -> vector<16x12xbf16>
    %c0_11 = arith.constant 0 : index
    %c0_12 = arith.constant 0 : index
    %32 = vector.load %arg4[%c0_11, %c0_12] : memref<12x12xbf16, #tpu.memory_space<vmem>>, vector<12x12xbf16>
    %cst = arith.constant dense<0.000000e+00> : vector<16x12xf32>
    %33 = tpu.matmul %31, %32, %cst {dimension_numbers = #tpu.dot_dimension_numbers<[1], [0], [0], [1], [0, 0, 1, 1], [], []>} : vector<16x12xbf16>, vector<12x12xbf16>, vector<16x12xf32> -> vector<16x12xf32>
    %c0_13 = arith.constant 0 : index
    %c0_14 = arith.constant 0 : index
    %34 = vector.load %arg5[%c0_13, %c0_14] : memref<16x12xf32, #tpu.memory_space<vmem>>, vector<16x12xf32>
    tpu.vector_store %arg5[%c0_13, %c0_14], %33 {strides = array<i32>} : memref<16x12xf32, #tpu.memory_space<vmem>>, vector<16x12xf32>,
    return
  }
  func.func @transform_0(%arg0: i32) -> (i32, i32) {
    %c0_i32 = arith.constant 0 : i32
    %c0_i32_0 = arith.constant 0 : i32
    return %arg0, %c0_i32 : i32, i32
  }
  func.func @transform_1(%arg0: i32) -> (i32, i32) {
    %c0_i32 = arith.constant 0 : i32
    %c0_i32_0 = arith.constant 0 : i32
    %c0_i32_1 = arith.constant 0 : i32
    return %c0_i32, %c0_i32_0 : i32, i32
  }
  func.func @transform_2(%arg0: i32) -> (i32, i32) {
    %c0_i32 = arith.constant 0 : i32
    %c0_i32_0 = arith.constant 0 : i32
    %c0_i32_1 = arith.constant 0 : i32
    return %c0_i32, %c0_i32_0 : i32, i32
  }
  func.func @transform_3(%arg0: i32) -> (i32, i32) {
    %c0_i32 = arith.constant 0 : i32
    %c0_i32_0 = arith.constant 0 : i32
    %c0_i32_1 = arith.constant 0 : i32
    return %c0_i32, %c0_i32_0 : i32, i32
  }
  func.func @transform_4(%arg0: i32) -> (i32, i32) {
    %c0_i32 = arith.constant 0 : i32
    %c0_i32_0 = arith.constant 0 : i32
    return %arg0, %c0_i32 : i32, i32
  }
}

</mosaic_0001>

<llo_original>
// kernel: tpu_custom_call.1
$region0: #{tpu_custom_call.1}
  #allocation0 [shape = 'u32[]', space=smem, size = 0x4, offset = 0x4, fixed_abs, tag = 'smem constant byte address 0x4 - core index']
  #allocation1 [shape = 'u32[72,128]{1,0:T(1,128)}', space=vmem, size = 0x9000, scoped, tag = 'internal scratch']
  %s0 = inlined_call_operand.vmem [shape: f32[16,4], index: 0, kind: input, shape index: {}]
  %s1 = inlined_call_operand.vmem [shape: f32[3,4], index: 1, kind: input, shape index: {}]
  %s2 = inlined_call_operand.vmem [shape: f32[3,4], index: 2, kind: input, shape index: {}]
  %s3 = inlined_call_operand.vmem [shape: bf16[12,12], index: 3, kind: input, shape index: {}]
  %s4 = inlined_call_operand.hbm [shape: f32[16,12], index: 4, kind: output, shape index: {}]
  %s5 = sld [smem:[#allocation0]]
  $region26: #{tpu_custom_call.1} parent=0
    _
  %s7 = ssub.s32 1, %s5
  %s8 = scalar_select 0, %s7, %s5
  $region1: #{tpu_custom_call.1} parent=0
    #allocation2 [shape = 'u8[8192]{0}', space=vmem, size = 0x2000, scoped, tag = 'output window, operand 0, single buffered']
    #allocation3 [shape = 's32[1]{0}', space=sflag, size = 0x4, scoped, tag = 'scoped memory for tpu_custom_call.1']
    %9 = vsyncpa [#allocation3], 0
    // Predicated region
    $region2: #{tpu_custom_call.1} parent=1 // pred_check
      _
    $region3: #{tpu_custom_call.1} parent=1 // pred_check_branch
      %11 = sbr.rel (0) target = $region5
    $region4: #{tpu_custom_call.1} parent=1 // pred_region
      _
    $region5: #{tpu_custom_call.1} parent=1 // pred_fallthru
      _
    // Predicated region
    $region6: #{tpu_custom_call.1} parent=1 // pred_check
      _
    $region7: #{tpu_custom_call.1} parent=1 // pred_check_branch
      %13 = sbr.rel (0) target = $region9
    $region8: #{tpu_custom_call.1} parent=1 // pred_region
      _
    $region9: #{tpu_custom_call.1} parent=1 // pred_fallthru
      _
    // Predicated region
    $region10: #{tpu_custom_call.1} parent=1 // pred_check
      _
    $region11: #{tpu_custom_call.1} parent=1 // pred_check_branch
      %15 = sbr.rel (0) target = $region13
    $region12: #{tpu_custom_call.1} parent=1 // pred_region
      _
    $region13: #{tpu_custom_call.1} parent=1 // pred_fallthru
      _
    // Predicated region
    $region14: #{tpu_custom_call.1} parent=1 // pred_check
      _
    $region15: #{tpu_custom_call.1} parent=1 // pred_check_branch
      %17 = sbr.rel (0) target = $region17
    $region16: #{tpu_custom_call.1} parent=1 // pred_region
      _
    $region17: #{tpu_custom_call.1} parent=1 // pred_fallthru
      _
    %v19 = vld [vmem:[%s0] sm:$0xff]
    %v20 = vld [vmem:[%s0 + $0x8] sm:$0xff]
    %v21 = vld [vmem:[%s1] sm:$0x1]
    %v22 = vld [vmem:[%s2] sm:$0x1]
    %v23 = vperm.slane %v21, 0
    %vm24 = vcmp.le.f32.partialorder %v23, %v19
    %vm25 = vcmp.le.f32.partialorder %v23, %v20
    %v26 = vperm.slane %v22, 0
    %vm27 = vcmp.lt.f32.partialorder %v19, %v26
    %vm28 = vcmp.lt.f32.partialorder %v20, %v26
    %vm29 = vmand %vm24, %vm27
    %vm30 = vmand %vm25, %vm28
    %v31 = vsel %vm29, 1, 0
    %v32 = vsel %vm30, 1, 0
    %v33 = vcvt.s32.f32 %v31
    %v34 = vcvt.s32.f32 %v32
    %v35 = vpack.c.bf16 %v33, %v33
    %v36 = vpack.c.bf16 %v34, %v34
    %v37 = vld [vmem:[%s1 + $0x1] sm:$0x1]
    %v38 = vld [vmem:[%s2 + $0x1] sm:$0x1]
    %v39 = vperm.slane %v37, 0
    %vm40 = vcmp.le.f32.partialorder %v39, %v19
    %vm41 = vcmp.le.f32.partialorder %v39, %v20
    %v42 = vperm.slane %v38, 0
    %vm43 = vcmp.lt.f32.partialorder %v19, %v42
    %vm44 = vcmp.lt.f32.partialorder %v20, %v42
    %vm45 = vmand %vm40, %vm43
    %vm46 = vmand %vm41, %vm44
    %v47 = vsel %vm45, 1, 0
    %v48 = vsel %vm46, 1, 0
    %v49 = vcvt.s32.f32 %v47
    %v50 = vcvt.s32.f32 %v48
    %v51 = vpack.c.bf16 %v49, %v49
    %v52 = vpack.c.bf16 %v50, %v50
    %v53 = vld [vmem:[%s1 + $0x2] sm:$0x1]
    %v54 = vld [vmem:[%s2 + $0x2] sm:$0x1]
    %v55 = vperm.slane %v53, 0
    %vm56 = vcmp.le.f32.partialorder %v55, %v19
    %vm57 = vcmp.le.f32.partialorder %v55, %v20
    %v58 = vperm.slane %v54, 0
    %vm59 = vcmp.lt.f32.partialorder %v19, %v58
    %vm60 = vcmp.lt.f32.partialorder %v20, %v58
    %vm61 = vmand %vm56, %vm59
    %vm62 = vmand %vm57, %vm60
    %v63 = vsel %vm61, 1, 0
    %v64 = vsel %vm62, 1, 0
    %v65 = vcvt.s32.f32 %v63
    %v66 = vcvt.s32.f32 %v64
    %v67 = vpack.c.bf16 %v65, %v65
    %v68 = vpack.c.bf16 %v66, %v66
    %v71 = vunpack.c.l.b16 %v35
    %v72 = vunpack.c.l.b16 %v36
    %v73 = vpack.c.b16 %v72, %v71
    %v76 = vunpack.c.l.b16 %v51
    %v77 = vunpack.c.l.b16 %v52
    %v78 = vpack.c.b16 %v77, %v76
    %79 = vrot.lane.b32.xlu0 %v78, 4
    %v80 = vpop.permute.xlu0 %79
    %v83 = vunpack.c.l.b16 %v67
    %v84 = vunpack.c.l.b16 %v68
    %v85 = vpack.c.b16 %v84, %v83
    %86 = vrot.lane.b32.xlu0 %v85, 8
    %v87 = vpop.permute.xlu0 %86
    %vm88 = vcmask 31744
    %v91 = vsel %vm88, %v73, %v80
    %vm92 = vcmask 64512
    %v94 = vsel %vm92, %v91, %v87
    %v95 = vld [vmem:[%s3] sm:$0xf]
    %v96 = vld [vmem:[%s3 + $0x4] sm:$0x3]
    %v99 = vunpack.c.l.b16 %v95
    %v100 = vunpack.c.l.b16 %v96
    %v101 = vpack.c.b16 %v100, %v99
    %vm102 = vcmask 97280
    %v103 = vsel %vm102, %v94, 0
    %vm105 = vcmask 1045504
    %v107 = vsel %vm105, %v101, 0
    %109 = vmatpush.bf16.msra.mxu0 0
    %110 = vmatpush.bf16.msra.mxu0 0
    %111 = vmatpush.bf16.msra.mxu0 0
    %112 = vmatpush.bf16.msra.mxu0 0
    %113 = vmatpush.bf16.msra.mxu0 0
    %114 = vmatpush.bf16.msra.mxu0 0
    %115 = vmatpush.bf16.msra.mxu0 0
    %116 = vmatpush.bf16.msra.mxu0 %v107
    %117 = vmatmul.bf16.gmra.mxu0 %v103
    %v118 = vpop.f32.mrf.mxu0
    %v119 = vadd.f32 0.0, %v118
    %v120 = vpop.f32.mrf.mxu0
    %v121 = vadd.f32 0.0, %v120
    %122 = vdwg.mxu0
    %123 = vst.msk [vmem:[#allocation2] sm:$0xff] %vm102, %v119
    %124 = vst.msk [vmem:[#allocation2 + $0x8] sm:$0xff] %vm102, %v121
    // Predicated region
    $region18: #{tpu_custom_call.1} parent=1 // pred_check
      _
    $region19: #{tpu_custom_call.1} parent=1 // pred_check_branch
      %126 = sbr.rel (0) target = $region21
    $region20: #{tpu_custom_call.1} parent=1 // pred_region
      %128 = vsyncadd [#allocation3], 0
      %s129 = sshll.u32 [#allocation2], 4
      %s130 = int_to_ptr.vmem [resolvable:$true] %s129
      %s131 = sshll.u32 %s4, 4
      %s132 = int_to_ptr.hbm [resolvable:$true] %s131
      %137 = dma.vmem_to_hbm [thread:$0]  %s130, 256, %s132, [#allocation3], 128, 128, 8
    $region21: #{tpu_custom_call.1} parent=1 // pred_fallthru
      _
    // Predicated region
    $region22: #{tpu_custom_call.1} parent=1 // pred_check
      _
    $region23: #{tpu_custom_call.1} parent=1 // pred_check_branch
      %139 = sbr.rel (0) target = $region25
    $region24: #{tpu_custom_call.1} parent=1 // pred_region
      %141 = dma.done [#allocation3], 256
    $region25: #{tpu_custom_call.1} parent=1 // pred_fallthru
      _
    %142 = vsyncpa [#allocation3], 1

</llo_original>
